<compile_context>
chip_gen: v5e
topology: v5e:2x2
jax: 0.10.0
libtpu: 0.0.40
codegen_flags: <defaults>
</compile_context>

<pallas_src>
import jax
import jax.numpy as jnp
from jax.experimental import pallas as pl
from jax.experimental.pallas import tpu as pltpu

IN_FEATURES = 768
OUT_FEATURES = 2

# Explicit scoped-VMEM limit: large enough for the biggest tiling below
# (~28.5 MiB on v7x at tm=4096), and safely under physical VMEM on every
# generation (64 MiB/TC on v7x, 128 MiB on v5e/v6e).
_VMEM_LIMIT_BYTES = 48 << 20


def linear_probe_kernel(h_ref, w_ref, b_ref, o_ref):
    # Hot path: one MXU matmul on the (tm, K) tile + broadcast bias add,
    # accumulated in f32.
    acc = jnp.dot(h_ref[...], w_ref[...], preferred_element_type=jnp.float32)
    o_ref[...] = (acc + b_ref[...]).astype(o_ref.dtype)


def _tm_max():
    # Generation-appropriate row-tile ceiling.
    #   v7x : 4096 rows -> 12 MiB per H buffer; needs the explicit vmem limit.
    #   v5e / v6e : 2048 rows -> 6 MiB per H buffer (~15 MiB total footprint).
    try:
        kind = jax.devices()[0].device_kind.lower()
    except Exception:
        kind = ""
    if "v7" in kind or "7x" in kind:
        return 4096
    return 2048


def _round_up(x, m):
    return ((x + m - 1) // m) * m


def _choose_tm(M, tm_max):
    # Pick a tile height so the grid has an EVEN number of steps (>= 2) for
    # megacore balance, subject to:
    #   * tm <= tm_max (VMEM budget / per-step-overhead amortization)
    #   * tm is a multiple of the sublane width (8), or spans the full batch.
    if M <= 8:
        # Too small to split into two >=8-row tiles: one full-extent block.
        return M
    steps = max(2, pl.cdiv(M, tm_max))
    if steps % 2:
        steps += 1
    return min(_round_up(pl.cdiv(M, steps), 8), tm_max)


def linear_probe(H, W, b):
    """H: (M, 768) ; W: (768, 2) (pre-transposed vs. torch) ; b: (2,)."""
    M, K = H.shape
    assert K == IN_FEATURES
    Kw, N = W.shape
    assert Kw == K and N == OUT_FEATURES
    b2d = b.reshape(1, N)

    tm = _choose_tm(M, _tm_max())
    grid = (pl.cdiv(M, tm),)

    cost = pl.CostEstimate(
        flops=2 * M * K * N,
        transcendentals=0,
        bytes_accessed=(M * K * 4) + (K * N * 4) + (N * 4) + (M * N * 4),
    )

    return pl.pallas_call(
        linear_probe_kernel,
        out_shape=jax.ShapeDtypeStruct((M, N), jnp.float32),
        grid_spec=pltpu.PrefetchScalarGridSpec(
            num_scalar_prefetch=0,
            grid=grid,
            in_specs=[
                # Streamed H row-tile (default double-buffering: the HBM read
                # of H is the binding resource, deeper buffering cannot help).
                pl.BlockSpec((tm, K), lambda i: (i, 0)),
                # VMEM-resident weight / bias: constant index_map, single
                # buffered to save the lane-padded duplicate (~400 KB).
                pl.BlockSpec((K, N), lambda i: (0, 0),
                             pipeline_mode=pl.Buffered(1)),
                pl.BlockSpec((1, N), lambda i: (0, 0),
                             pipeline_mode=pl.Buffered(1)),
            ],
            # Deliberately (tm, 2): do NOT pad N to 128 lanes (see header).
            out_specs=pl.BlockSpec((tm, N), lambda i: (i, 0)),
        ),
        compiler_params=pltpu.CompilerParams(
            dimension_semantics=("parallel",),   # megacore sharding on v7x
            vmem_limit_bytes=_VMEM_LIMIT_BYTES,
        ),
        cost_estimate=cost,
    )(H, W, b2d)


if __name__ == "__main__":
    key = jax.random.PRNGKey(0)
    k_h, k_w, k_b, k_h2, k_h3 = jax.random.split(key, 5)

    # Deterministic synthetic parameters (torch stores weight as (2, 768);
    # kept pre-transposed as (768, 2) for the kernel).
    bound = 1.0 / (IN_FEATURES ** 0.5)
    W = jax.random.uniform(
        k_w, (IN_FEATURES, OUT_FEATURES), dtype=jnp.float32,
        minval=-bound, maxval=bound)
    b = jax.random.uniform(
        k_b, (OUT_FEATURES,), dtype=jnp.float32, minval=-bound, maxval=bound)

    # 1) Tiny batch (single full-extent block path).
    batch = 8
    H = jax.random.normal(k_h, (batch, IN_FEATURES), dtype=jnp.float32)
    y = linear_probe(H, W, b)
    jax.block_until_ready(y)
    y_ref = H @ W + b
    assert y.shape == (batch, OUT_FEATURES)
    assert jnp.allclose(y, y_ref, atol=1e-4, rtol=1e-4)

    # 2) Small batch that is forced onto a 2-step (megacore-friendly) grid
    #    with a ragged final tile.
    batch2 = 20
    H2 = jax.random.normal(k_h2, (batch2, IN_FEATURES), dtype=jnp.float32)
    y2 = linear_probe(H2, W, b)
    jax.block_until_ready(y2)
    y2_ref = H2 @ W + b
    assert y2.shape == (batch2, OUT_FEATURES)
    assert jnp.allclose(y2, y2_ref, atol=1e-4, rtol=1e-4)

    # 3) Larger batch exercising the tiled / pipelined path (even-step grid,
    #    ragged last tile).
    batch3 = 2570
    H3 = jax.random.normal(k_h3, (batch3, IN_FEATURES), dtype=jnp.float32)
    y3 = linear_probe(H3, W, b)
    jax.block_until_ready(y3)
    y3_ref = H3 @ W + b
    assert y3.shape == (batch3, OUT_FEATURES)
    assert jnp.allclose(y3, y3_ref, atol=1e-4, rtol=1e-4)

    print("KERNEL_OK")
</pallas_src>

<mosaic_0001>
module attributes {stable_mosaic.version = 11 : i64} {
  func.func @linear_probe_kernel(%arg0: i32, %arg1: memref<8x768xf32, #tpu.memory_space<vmem>>, %arg2: memref<768x2xf32, #tpu.memory_space<vmem>>, %arg3: memref<1x2xf32, #tpu.memory_space<vmem>>, %arg4: memref<8x2xf32, #tpu.memory_space<vmem>>) attributes {dimension_semantics = [#tpu.dimension_semantics<parallel>], iteration_bounds = array<i64: 1>, scalar_prefetch = 0 : i64, scratch_operands = 0 : i64, tpu.core_type = #tpu.core_type<tc>, window_params = [{transform_indices = @transform_0, window_bounds = array<i64: 8, 768>}, {pipeline_mode = #tpu.pipeline_mode<synchronous>, transform_indices = @transform_1, window_bounds = array<i64: 768, 2>}, {pipeline_mode = #tpu.pipeline_mode<synchronous>, transform_indices = @transform_2, window_bounds = array<i64: 1, 2>}, {transform_indices = @transform_3, window_bounds = array<i64: 8, 2>}]} {
    %c0 = arith.constant 0 : index
    %c0_0 = arith.constant 0 : index
    %0 = vector.load %arg1[%c0, %c0_0] : memref<8x768xf32, #tpu.memory_space<vmem>>, vector<8x768xf32>
    %c0_1 = arith.constant 0 : index
    %c0_2 = arith.constant 0 : index
    %1 = vector.load %arg2[%c0_1, %c0_2] : memref<768x2xf32, #tpu.memory_space<vmem>>, vector<768x2xf32>
    %cst = arith.constant dense<0.000000e+00> : vector<8x2xf32>
    %2 = tpu.matmul %0, %1, %cst {dimension_numbers = #tpu.dot_dimension_numbers<[1], [0], [0], [1], [0, 0, 1, 1], [], []>} : vector<8x768xf32>, vector<768x2xf32>, vector<8x2xf32> -> vector<8x2xf32>
    %c0_3 = arith.constant 0 : index
    %c0_4 = arith.constant 0 : index
    %3 = vector.load %arg3[%c0_3, %c0_4] : memref<1x2xf32, #tpu.memory_space<vmem>>, vector<1x2xf32>
    %4 = vector.broadcast %3 : vector<1x2xf32> to vector<8x2xf32>
    %5 = arith.addf %2, %4 : vector<8x2xf32>
    %c0_5 = arith.constant 0 : index
    %c0_6 = arith.constant 0 : index
    %6 = vector.load %arg4[%c0_5, %c0_6] : memref<8x2xf32, #tpu.memory_space<vmem>>, vector<8x2xf32>
    tpu.vector_store %arg4[%c0_5, %c0_6], %5 {strides = array<i32>} : memref<8x2xf32, #tpu.memory_space<vmem>>, vector<8x2xf32>,
    return
  }
  func.func @transform_0(%arg0: i32) -> (i32, i32) {
    %c0_i32 = arith.constant 0 : i32
    %c0_i32_0 = arith.constant 0 : i32
    return %arg0, %c0_i32 : i32, i32
  }
  func.func @transform_1(%arg0: i32) -> (i32, i32) {
    %c0_i32 = arith.constant 0 : i32
    %c0_i32_0 = arith.constant 0 : i32
    %c0_i32_1 = arith.constant 0 : i32
    return %c0_i32, %c0_i32_0 : i32, i32
  }
  func.func @transform_2(%arg0: i32) -> (i32, i32) {
    %c0_i32 = arith.constant 0 : i32
    %c0_i32_0 = arith.constant 0 : i32
    %c0_i32_1 = arith.constant 0 : i32
    return %c0_i32, %c0_i32_0 : i32, i32
  }
  func.func @transform_3(%arg0: i32) -> (i32, i32) {
    %c0_i32 = arith.constant 0 : i32
    %c0_i32_0 = arith.constant 0 : i32
    return %arg0, %c0_i32 : i32, i32
  }
}

</mosaic_0001>

<llo_original>
// kernel: tpu_custom_call.1
$region0: #{tpu_custom_call.1}
  #allocation0 [shape = 'u32[]', space=smem, size = 0x4, offset = 0x4, fixed_abs, tag = 'smem constant byte address 0x4 - core index']
  #allocation1 [shape = 'u32[72,128]{1,0:T(1,128)}', space=vmem, size = 0x9000, scoped, tag = 'internal scratch']
  %s0 = inlined_call_operand.vmem [shape: f32[8,768], index: 0, kind: input, shape index: {}]
  %s1 = inlined_call_operand.vmem [shape: f32[768,2], index: 1, kind: input, shape index: {}]
  %s2 = inlined_call_operand.vmem [shape: f32[1,2], index: 2, kind: input, shape index: {}]
  %s3 = inlined_call_operand.vmem [shape: f32[8,2], index: 3, kind: output, shape index: {}]
  %s4 = sld [smem:[#allocation0]]
  $region22: #{tpu_custom_call.1} parent=0
    _
  %s6 = ssub.s32 1, %s4
  %s7 = scalar_select 0, %s6, %s4
  // Predicated region
  $region2: #{tpu_custom_call.1} parent=0 // pred_check
    _
  $region3: #{tpu_custom_call.1} parent=0 // pred_check_branch
    %9 = sbr.rel (0) target = $region5
  $region4: #{tpu_custom_call.1} parent=0 // pred_region
    _
  $region5: #{tpu_custom_call.1} parent=0 // pred_fallthru
    _
  // Predicated region
  $region6: #{tpu_custom_call.1} parent=0 // pred_check
    _
  $region7: #{tpu_custom_call.1} parent=0 // pred_check_branch
    %11 = sbr.rel (0) target = $region9
  $region8: #{tpu_custom_call.1} parent=0 // pred_region
    _
  $region9: #{tpu_custom_call.1} parent=0 // pred_fallthru
    _
  // Predicated region
  $region10: #{tpu_custom_call.1} parent=0 // pred_check
    _
  $region11: #{tpu_custom_call.1} parent=0 // pred_check_branch
    %13 = sbr.rel (0) target = $region13
  $region12: #{tpu_custom_call.1} parent=0 // pred_region
    _
  $region13: #{tpu_custom_call.1} parent=0 // pred_fallthru
    _
  %v14 = vld [vmem:[%s0] sm:$0xff]
  %v15 = vld [vmem:[%s0 + $0x8] sm:$0xff]
  %v16 = vld [vmem:[%s0 + $0x10] sm:$0xff]
  %v17 = vld [vmem:[%s0 + $0x18] sm:$0xff]
  %v18 = vld [vmem:[%s0 + $0x20] sm:$0xff]
  %v19 = vld [vmem:[%s0 + $0x28] sm:$0xff]
  %v20 = vld [vmem:[%s1] sm:$0xff]
  %v21 = vld [vmem:[%s1 + $0x8] sm:$0xff]
  %v22 = vld [vmem:[%s1 + $0x10] sm:$0xff]
  %v23 = vld [vmem:[%s1 + $0x18] sm:$0xff]
  %v24 = vld [vmem:[%s1 + $0x20] sm:$0xff]
  %v25 = vld [vmem:[%s1 + $0x28] sm:$0xff]
  %v26 = vld [vmem:[%s1 + $0x30] sm:$0xff]
  %v27 = vld [vmem:[%s1 + $0x38] sm:$0xff]
  %v28 = vld [vmem:[%s1 + $0x40] sm:$0xff]
  %v29 = vld [vmem:[%s1 + $0x48] sm:$0xff]
  %v30 = vld [vmem:[%s1 + $0x50] sm:$0xff]
  %v31 = vld [vmem:[%s1 + $0x58] sm:$0xff]
  %v32 = vld [vmem:[%s1 + $0x60] sm:$0xff]
  %v33 = vld [vmem:[%s1 + $0x68] sm:$0xff]
  %v34 = vld [vmem:[%s1 + $0x70] sm:$0xff]
  %v35 = vld [vmem:[%s1 + $0x78] sm:$0xff]
  %v36 = vld [vmem:[%s1 + $0x80] sm:$0xff]
  %v37 = vld [vmem:[%s1 + $0x88] sm:$0xff]
  %v38 = vld [vmem:[%s1 + $0x90] sm:$0xff]
  %v39 = vld [vmem:[%s1 + $0x98] sm:$0xff]
  %v40 = vld [vmem:[%s1 + $0xa0] sm:$0xff]
  %v41 = vld [vmem:[%s1 + $0xa8] sm:$0xff]
  %v42 = vld [vmem:[%s1 + $0xb0] sm:$0xff]
  %v43 = vld [vmem:[%s1 + $0xb8] sm:$0xff]
  %v44 = vld [vmem:[%s1 + $0xc0] sm:$0xff]
  %v45 = vld [vmem:[%s1 + $0xc8] sm:$0xff]
  %v46 = vld [vmem:[%s1 + $0xd0] sm:$0xff]
  %v47 = vld [vmem:[%s1 + $0xd8] sm:$0xff]
  %v48 = vld [vmem:[%s1 + $0xe0] sm:$0xff]
  %v49 = vld [vmem:[%s1 + $0xe8] sm:$0xff]
  %v50 = vld [vmem:[%s1 + $0xf0] sm:$0xff]
  %v51 = vld [vmem:[%s1 + $0xf8] sm:$0xff]
  %v52 = vld [vmem:[%s1 + $0x100] sm:$0xff]
  %v53 = vld [vmem:[%s1 + $0x108] sm:$0xff]
  %v54 = vld [vmem:[%s1 + $0x110] sm:$0xff]
  %v55 = vld [vmem:[%s1 + $0x118] sm:$0xff]
  %v56 = vld [vmem:[%s1 + $0x120] sm:$0xff]
  %v57 = vld [vmem:[%s1 + $0x128] sm:$0xff]
  %v58 = vld [vmem:[%s1 + $0x130] sm:$0xff]
  %v59 = vld [vmem:[%s1 + $0x138] sm:$0xff]
  %v60 = vld [vmem:[%s1 + $0x140] sm:$0xff]
  %v61 = vld [vmem:[%s1 + $0x148] sm:$0xff]
  %v62 = vld [vmem:[%s1 + $0x150] sm:$0xff]
  %v63 = vld [vmem:[%s1 + $0x158] sm:$0xff]
  %v64 = vld [vmem:[%s1 + $0x160] sm:$0xff]
  %v65 = vld [vmem:[%s1 + $0x168] sm:$0xff]
  %v66 = vld [vmem:[%s1 + $0x170] sm:$0xff]
  %v67 = vld [vmem:[%s1 + $0x178] sm:$0xff]
  %v68 = vld [vmem:[%s1 + $0x180] sm:$0xff]
  %v69 = vld [vmem:[%s1 + $0x188] sm:$0xff]
  %v70 = vld [vmem:[%s1 + $0x190] sm:$0xff]
  %v71 = vld [vmem:[%s1 + $0x198] sm:$0xff]
  %v72 = vld [vmem:[%s1 + $0x1a0] sm:$0xff]
  %v73 = vld [vmem:[%s1 + $0x1a8] sm:$0xff]
  %v74 = vld [vmem:[%s1 + $0x1b0] sm:$0xff]
  %v75 = vld [vmem:[%s1 + $0x1b8] sm:$0xff]
  %v76 = vld [vmem:[%s1 + $0x1c0] sm:$0xff]
  %v77 = vld [vmem:[%s1 + $0x1c8] sm:$0xff]
  %v78 = vld [vmem:[%s1 + $0x1d0] sm:$0xff]
  %v79 = vld [vmem:[%s1 + $0x1d8] sm:$0xff]
  %v80 = vld [vmem:[%s1 + $0x1e0] sm:$0xff]
  %v81 = vld [vmem:[%s1 + $0x1e8] sm:$0xff]
  %v82 = vld [vmem:[%s1 + $0x1f0] sm:$0xff]
  %v83 = vld [vmem:[%s1 + $0x1f8] sm:$0xff]
  %v84 = vld [vmem:[%s1 + $0x200] sm:$0xff]
  %v85 = vld [vmem:[%s1 + $0x208] sm:$0xff]
  %v86 = vld [vmem:[%s1 + $0x210] sm:$0xff]
  %v87 = vld [vmem:[%s1 + $0x218] sm:$0xff]
  %v88 = vld [vmem:[%s1 + $0x220] sm:$0xff]
  %v89 = vld [vmem:[%s1 + $0x228] sm:$0xff]
  %v90 = vld [vmem:[%s1 + $0x230] sm:$0xff]
  %v91 = vld [vmem:[%s1 + $0x238] sm:$0xff]
  %v92 = vld [vmem:[%s1 + $0x240] sm:$0xff]
  %v93 = vld [vmem:[%s1 + $0x248] sm:$0xff]
  %v94 = vld [vmem:[%s1 + $0x250] sm:$0xff]
  %v95 = vld [vmem:[%s1 + $0x258] sm:$0xff]
  %v96 = vld [vmem:[%s1 + $0x260] sm:$0xff]
  %v97 = vld [vmem:[%s1 + $0x268] sm:$0xff]
  %v98 = vld [vmem:[%s1 + $0x270] sm:$0xff]
  %v99 = vld [vmem:[%s1 + $0x278] sm:$0xff]
  %v100 = vld [vmem:[%s1 + $0x280] sm:$0xff]
  %v101 = vld [vmem:[%s1 + $0x288] sm:$0xff]
  %v102 = vld [vmem:[%s1 + $0x290] sm:$0xff]
  %v103 = vld [vmem:[%s1 + $0x298] sm:$0xff]
  %v104 = vld [vmem:[%s1 + $0x2a0] sm:$0xff]
  %v105 = vld [vmem:[%s1 + $0x2a8] sm:$0xff]
  %v106 = vld [vmem:[%s1 + $0x2b0] sm:$0xff]
  %v107 = vld [vmem:[%s1 + $0x2b8] sm:$0xff]
  %v108 = vld [vmem:[%s1 + $0x2c0] sm:$0xff]
  %v109 = vld [vmem:[%s1 + $0x2c8] sm:$0xff]
  %v110 = vld [vmem:[%s1 + $0x2d0] sm:$0xff]
  %v111 = vld [vmem:[%s1 + $0x2d8] sm:$0xff]
  %v112 = vld [vmem:[%s1 + $0x2e0] sm:$0xff]
  %v113 = vld [vmem:[%s1 + $0x2e8] sm:$0xff]
  %v114 = vld [vmem:[%s1 + $0x2f0] sm:$0xff]
  %v115 = vld [vmem:[%s1 + $0x2f8] sm:$0xff]
  %v116 = vld [vmem:[%s2] sm:$0x1]
  %v118 = vperm.slane %v116, 0
  %120 = vmatpush.msra.mxu0 %v35
  %121 = vmatpush.msra.mxu0 %v34
  %122 = vmatpush.msra.mxu0 %v33
  %123 = vmatpush.msra.mxu0 %v32
  %124 = vmatpush.msra.mxu0 %v31
  %125 = vmatpush.msra.mxu0 %v30
  %126 = vmatpush.msra.mxu0 %v29
  %127 = vmatpush.msra.mxu0 %v28
  %128 = vmatpush.msra.mxu0 %v27
  %129 = vmatpush.msra.mxu0 %v26
  %130 = vmatpush.msra.mxu0 %v25
  %131 = vmatpush.msra.mxu0 %v24
  %132 = vmatpush.msra.mxu0 %v23
  %133 = vmatpush.msra.mxu0 %v22
  %134 = vmatpush.msra.mxu0 %v21
  %135 = vmatpush.msra.mxu0 %v20
  %136 = vmatmul.f32.gmra.mxu0 %v14
  %v137 = vpop.f32.mrf.mxu0
  %v138 = vadd.f32 %v118, %v137
  %139 = vdwg.mxu0
  %140 = vmatpush.msra.mxu0 %v51
  %141 = vmatpush.msra.mxu0 %v50
  %142 = vmatpush.msra.mxu0 %v49
  %143 = vmatpush.msra.mxu0 %v48
  %144 = vmatpush.msra.mxu0 %v47
  %145 = vmatpush.msra.mxu0 %v46
  %146 = vmatpush.msra.mxu0 %v45
  %147 = vmatpush.msra.mxu0 %v44
  %148 = vmatpush.msra.mxu0 %v43
  %149 = vmatpush.msra.mxu0 %v42
  %150 = vmatpush.msra.mxu0 %v41
  %151 = vmatpush.msra.mxu0 %v40
  %152 = vmatpush.msra.mxu0 %v39
  %153 = vmatpush.msra.mxu0 %v38
  %154 = vmatpush.msra.mxu0 %v37
  %155 = vmatpush.msra.mxu0 %v36
  %156 = vmatmul.f32.gmra.mxu0 %v15
  %v157 = vpop.f32.mrf.mxu0
  %v158 = vadd.f32 %v138, %v157
  %159 = vdwg.mxu0
  %160 = vmatpush.msra.mxu0 %v67
  %161 = vmatpush.msra.mxu0 %v66
  %162 = vmatpush.msra.mxu0 %v65
  %163 = vmatpush.msra.mxu0 %v64
  %164 = vmatpush.msra.mxu0 %v63
  %165 = vmatpush.msra.mxu0 %v62
  %166 = vmatpush.msra.mxu0 %v61
  %167 = vmatpush.msra.mxu0 %v60
  %168 = vmatpush.msra.mxu0 %v59
  %169 = vmatpush.msra.mxu0 %v58
  %170 = vmatpush.msra.mxu0 %v57
  %171 = vmatpush.msra.mxu0 %v56
  %172 = vmatpush.msra.mxu0 %v55
  %173 = vmatpush.msra.mxu0 %v54
  %174 = vmatpush.msra.mxu0 %v53
  %175 = vmatpush.msra.mxu0 %v52
  %176 = vmatmul.f32.gmra.mxu0 %v16
  %v177 = vpop.f32.mrf.mxu0
  %v178 = vadd.f32 %v158, %v177
  %179 = vdwg.mxu0
  %180 = vmatpush.msra.mxu0 %v83
  %181 = vmatpush.msra.mxu0 %v82
  %182 = vmatpush.msra.mxu0 %v81
  %183 = vmatpush.msra.mxu0 %v80
  %184 = vmatpush.msra.mxu0 %v79
  %185 = vmatpush.msra.mxu0 %v78
  %186 = vmatpush.msra.mxu0 %v77
  %187 = vmatpush.msra.mxu0 %v76
  %188 = vmatpush.msra.mxu0 %v75
  %189 = vmatpush.msra.mxu0 %v74
  %190 = vmatpush.msra.mxu0 %v73
  %191 = vmatpush.msra.mxu0 %v72
  %192 = vmatpush.msra.mxu0 %v71
  %193 = vmatpush.msra.mxu0 %v70
  %194 = vmatpush.msra.mxu0 %v69
  %195 = vmatpush.msra.mxu0 %v68
  %196 = vmatmul.f32.gmra.mxu0 %v17
  %v197 = vpop.f32.mrf.mxu0
  %v198 = vadd.f32 %v178, %v197
  %199 = vdwg.mxu0
  %200 = vmatpush.msra.mxu0 %v99
  %201 = vmatpush.msra.mxu0 %v98
  %202 = vmatpush.msra.mxu0 %v97
  %203 = vmatpush.msra.mxu0 %v96
  %204 = vmatpush.msra.mxu0 %v95
  %205 = vmatpush.msra.mxu0 %v94
  %206 = vmatpush.msra.mxu0 %v93
  %207 = vmatpush.msra.mxu0 %v92
  %208 = vmatpush.msra.mxu0 %v91
  %209 = vmatpush.msra.mxu0 %v90
  %210 = vmatpush.msra.mxu0 %v89
  %211 = vmatpush.msra.mxu0 %v88
  %212 = vmatpush.msra.mxu0 %v87
  %213 = vmatpush.msra.mxu0 %v86
  %214 = vmatpush.msra.mxu0 %v85
  %215 = vmatpush.msra.mxu0 %v84
  %216 = vmatmul.f32.gmra.mxu0 %v18
  %v217 = vpop.f32.mrf.mxu0
  %v218 = vadd.f32 %v198, %v217
  %219 = vdwg.mxu0
  %220 = vmatpush.msra.mxu0 %v115
  %221 = vmatpush.msra.mxu0 %v114
  %222 = vmatpush.msra.mxu0 %v113
  %223 = vmatpush.msra.mxu0 %v112
  %224 = vmatpush.msra.mxu0 %v111
  %225 = vmatpush.msra.mxu0 %v110
  %226 = vmatpush.msra.mxu0 %v109
  %227 = vmatpush.msra.mxu0 %v108
  %228 = vmatpush.msra.mxu0 %v107
  %229 = vmatpush.msra.mxu0 %v106
  %230 = vmatpush.msra.mxu0 %v105
  %231 = vmatpush.msra.mxu0 %v104
  %232 = vmatpush.msra.mxu0 %v103
  %233 = vmatpush.msra.mxu0 %v102
  %234 = vmatpush.msra.mxu0 %v101
  %235 = vmatpush.msra.mxu0 %v100
  %236 = vmatmul.f32.gmra.mxu0 %v19
  %v237 = vpop.f32.mrf.mxu0
  %v238 = vadd.f32 %v218, %v237
  %239 = vdwg.mxu0
  %vm240 = vcmask 15360
  %241 = vst.msk [vmem:[%s3] sm:$0xff] %vm240, %v238
  // Predicated region
  $region14: #{tpu_custom_call.1} parent=0 // pred_check
    _
  $region15: #{tpu_custom_call.1} parent=0 // pred_check_branch
    %243 = sbr.rel (0) target = $region17
  $region16: #{tpu_custom_call.1} parent=0 // pred_region
    _
  $region17: #{tpu_custom_call.1} parent=0 // pred_fallthru
    _
  // Predicated region
  $region18: #{tpu_custom_call.1} parent=0 // pred_check
    _
  $region19: #{tpu_custom_call.1} parent=0 // pred_check_branch
    %245 = sbr.rel (0) target = $region21
  $region20: #{tpu_custom_call.1} parent=0 // pred_region
    _
  $region21: #{tpu_custom_call.1} parent=0 // pred_fallthru
    _

</llo_original>
